<compile_context>
chip_gen: v5e
topology: v5e:2x2
jax: 0.10.0
libtpu: 0.0.40
codegen_flags: <defaults>
</compile_context>

<pallas_src>
import functools

import jax
import jax.numpy as jnp
from jax import lax
from jax.experimental import pallas as pl
from jax.experimental.pallas import tpu as pltpu

IN_FEATURES = 10
OUT_FEATURES = 1


def linear_kernel(x_ref, w_ref, b_ref, o_ref):
    # x_ref: [tb, 10] VMEM, w_ref: [1, 10] VMEM, b_ref: [1] SMEM, o_ref: [1, tb] VMEM
    acc = lax.dot_general(
        w_ref[...], x_ref[...],
        dimension_numbers=(((1,), (1,)), ((), ())),   # contract the feature axis
        preferred_element_type=jnp.float32,
    )                                                 # -> [1, tb] lane-dense row
    o_ref[...] = (acc + b_ref[0]).astype(o_ref.dtype)


@functools.partial(jax.jit, static_argnames=("tile_batch",))
def simple_model_forward(x, weight, bias, *, tile_batch=8192):
    """x: [B, 10] f32; weight: [1, 10] f32 (native PyTorch layout); bias: [1] f32."""
    B = x.shape[0]
    if B <= tile_batch:
        # Full-extent block: always legal regardless of alignment.
        tb = B
    else:
        # Keep the block batch dim a multiple of 128 so the (1, tb) output block is
        # lane-aligned and the (tb, 10) input block is sublane-aligned.
        tb = max(128, (tile_batch // 128) * 128)
    grid = (pl.cdiv(B, tb),)

    out = pl.pallas_call(
        linear_kernel,
        out_shape=jax.ShapeDtypeStruct((1, B), x.dtype),   # lane-dense (1, B)
        grid=grid,
        in_specs=[
            pl.BlockSpec((tb, IN_FEATURES), lambda i: (i, 0)),    # x tiles (pipelined)
            pl.BlockSpec((1, IN_FEATURES), lambda i: (0, 0)),     # weight, resident
            pl.BlockSpec(memory_space=pltpu.MemorySpace.SMEM),    # bias scalar in SMEM
        ],
        out_specs=pl.BlockSpec((1, tb), lambda i: (0, i)),        # full-width row store
        compiler_params=pltpu.CompilerParams(
            dimension_semantics=("parallel",)),                   # v7x: shard over 2 TCs
        cost_estimate=pl.CostEstimate(
            flops=2 * B * IN_FEATURES,
            transcendentals=0,
            bytes_accessed=B * IN_FEATURES * 4 + B * 4 + IN_FEATURES * 4 + 4),
    )(x, weight, bias)

    # (1, B) -> (B, 1): identical bytes, free reshape in the wrapper.
    return out.reshape(B, OUT_FEATURES)


def init_params(key):
    # Mimic PyTorch's default nn.Linear init: U(-1/sqrt(fan_in), 1/sqrt(fan_in)).
    kw, kb = jax.random.split(key)
    bound = 1.0 / jnp.sqrt(float(IN_FEATURES))
    weight = jax.random.uniform(
        kw, (OUT_FEATURES, IN_FEATURES), jnp.float32, -bound, bound)
    bias = jax.random.uniform(
        kb, (OUT_FEATURES,), jnp.float32, -bound, bound)
    return weight, bias


if __name__ == "__main__":
    key = jax.random.PRNGKey(0)
    kx, kp = jax.random.split(key)

    batch = 256
    x = jax.random.normal(kx, (batch, IN_FEATURES), jnp.float32)
    weight, bias = init_params(kp)

    # Small tile so the batch grid / double-buffered pipeline is exercised even at
    # test size (grid = (2,)); production callers use the default 8192-row tile.
    out = simple_model_forward(x, weight, bias, tile_batch=128)
    out = jax.block_until_ready(out)

    # Sanity check against pure-JAX reference.
    ref = x @ weight.T + bias
    assert out.shape == (batch, OUT_FEATURES)
    assert jnp.allclose(out, ref, atol=1e-5, rtol=1e-5)

    print("KERNEL_OK")
</pallas_src>

<mosaic_0001>
module attributes {stable_mosaic.version = 11 : i64} {
  func.func @linear_kernel(%arg0: i32, %arg1: memref<128x10xf32, #tpu.memory_space<vmem>>, %arg2: memref<1x10xf32, #tpu.memory_space<vmem>>, %arg3: memref<1xf32, #tpu.memory_space<smem>>, %arg4: memref<1x128xf32, #tpu.memory_space<vmem>>) attributes {dimension_semantics = [#tpu.dimension_semantics<parallel>], iteration_bounds = array<i64: 2>, scalar_prefetch = 0 : i64, scratch_operands = 0 : i64, tpu.core_type = #tpu.core_type<tc>, window_params = [{transform_indices = @transform_0, window_bounds = array<i64: 128, 10>}, {pipeline_mode = #tpu.pipeline_mode<synchronous>, transform_indices = @transform_1, window_bounds = array<i64: 1, 10>}, {transform_indices = @transform_2, window_bounds = array<i64: 1>}, {transform_indices = @transform_3, window_bounds = array<i64: 1, 128>}]} {
    %c0 = arith.constant 0 : index
    %c0_0 = arith.constant 0 : index
    %0 = vector.load %arg2[%c0, %c0_0] : memref<1x10xf32, #tpu.memory_space<vmem>>, vector<1x10xf32>
    %c0_1 = arith.constant 0 : index
    %c0_2 = arith.constant 0 : index
    %1 = vector.load %arg1[%c0_1, %c0_2] : memref<128x10xf32, #tpu.memory_space<vmem>>, vector<128x10xf32>
    %cst = arith.constant dense<0.000000e+00> : vector<1x128xf32>
    %2 = tpu.matmul %0, %1, %cst {dimension_numbers = #tpu.dot_dimension_numbers<[1], [1], [0], [0], [0, 0, 1, 0], [], []>} : vector<1x10xf32>, vector<128x10xf32>, vector<1x128xf32> -> vector<1x128xf32>
    %c0_3 = arith.constant 0 : index
    %3 = memref.load %arg3[%c0_3] : memref<1xf32, #tpu.memory_space<smem>>
    %4 = vector.broadcast %3 : f32 to vector<1x128xf32>
    %5 = arith.addf %2, %4 : vector<1x128xf32>
    %c0_4 = arith.constant 0 : index
    %c0_5 = arith.constant 0 : index
    %6 = vector.load %arg4[%c0_4, %c0_5] : memref<1x128xf32, #tpu.memory_space<vmem>>, vector<1x128xf32>
    tpu.vector_store %arg4[%c0_4, %c0_5], %5 {strides = array<i32>} : memref<1x128xf32, #tpu.memory_space<vmem>>, vector<1x128xf32>,
    return
  }
  func.func @transform_0(%arg0: i32) -> (i32, i32) {
    %c0_i32 = arith.constant 0 : i32
    %c0_i32_0 = arith.constant 0 : i32
    return %arg0, %c0_i32 : i32, i32
  }
  func.func @transform_1(%arg0: i32) -> (i32, i32) {
    %c0_i32 = arith.constant 0 : i32
    %c0_i32_0 = arith.constant 0 : i32
    %c0_i32_1 = arith.constant 0 : i32
    return %c0_i32, %c0_i32_0 : i32, i32
  }
  func.func @transform_2(%arg0: i32) -> i32 {
    %c0_i32 = arith.constant 0 : i32
    %c0_i32_0 = arith.constant 0 : i32
    return %c0_i32 : i32
  }
  func.func @transform_3(%arg0: i32) -> (i32, i32) {
    %c0_i32 = arith.constant 0 : i32
    %c0_i32_0 = arith.constant 0 : i32
    return %c0_i32, %arg0 : i32, i32
  }
}

</mosaic_0001>

<llo_original>
// kernel: simple_model_forward.1
$region0: #{simple_model_forward.1}
  #allocation0 [shape = 'u32[]', space=smem, size = 0x4, offset = 0x4, fixed_abs, tag = 'smem constant byte address 0x4 - core index']
  #allocation1 [shape = 'u32[72,128]{1,0:T(1,128)}', space=vmem, size = 0x9000, scoped, tag = 'internal scratch']
  #allocation2 [shape = 'f32[1]{0:T(128)S(6)}', space=smem, size = 0x200, scoped, tag = 'scoped memory for simple_model_forward.1']
  %s0 = inlined_call_operand.vmem [shape: f32[256,10], index: 0, kind: input, shape index: {}]
  %s1 = inlined_call_operand.vmem [shape: f32[1,10], index: 1, kind: input, shape index: {}]
  %s2 = inlined_call_operand.<no memory space> [shape: f32[1], index: 2, kind: input, shape index: {}]
  %s3 = inlined_call_operand.hbm [shape: f32[1,256], index: 3, kind: output, shape index: {}]
  %s4 = sld [smem:[#allocation0]]
  $region45: #{simple_model_forward.1} parent=0
    _
  %s6 = ssub.s32 1, %s4
  %s7 = scalar_select 0, %s6, %s4
  %8 = sst [smem:[#allocation2]] %s2
  $region1: #{simple_model_forward.1} parent=0
    #allocation3 [shape = 'u8[1024]{0}', space=vmem, size = 0x400, scoped, tag = 'output window, operand 0']
    #allocation4 [shape = 's32[2]{0}', space=sflag, size = 0x8, scoped, tag = 'scoped memory for simple_model_forward.1']
    %9 = vsyncpa [#allocation4], 0
    %s10 = scalar_lea.sflag [#allocation4], 1
    %11 = vsyncpa %s10, 0
    loop: start=0, step=1, limit=4
    $region2: #{simple_model_forward.1} parent=1 // loop_pre_header
      _
    $region3: #{simple_model_forward.1} parent=1 // loop_header
      %s13 = sphi 0, %s17
      %p14 = scmp.ge.s32.totalorder %s13, 4
      %s23 = sphi 0, %s25
      %s26 = sphi 0, %s23
      %s27 = sphi 0, %s26
      %s43 = sphi 0, %s27
      %s47 = sphi 0, %s47
      %s49 = sphi 0, %s47
      %s50 = sphi 0, %s49
      %s64 = sphi 0, %s50
      %s68 = sphi 0, %s68
      %s70 = sphi 0, %s68
      %s71 = sphi 0, %s70
      %s85 = sphi 0, %s71
      %s91 = sphi 0, %s93
      %s94 = sphi 0, %s91
      %s95 = sphi 0, %s94
      %s111 = sphi 0, %s95
    $region4: #{simple_model_forward.1} parent=1 // loop_header_branch
      %16 = sbr.rel (%p14) target = $region8
    $region5: #{simple_model_forward.1} parent=1 // loop_body
      %s18 = ssub.s32 %s13, 1
      %s19 = ssub.s32 %s13, 2
      %s20 = sadd.s32 %s13, 1
      %s21 = ssub.s32 %s13, %s20
      %p22 = scmp.eq.s32.totalorder %s21, 0
      %s24 = sadd.s32 %s23, 1
      %s25 = scalar_select %p22, %s23, %s24
      %p28 = pneg %p22
      %p29 = scmp.eq.s32.totalorder %s13, 1
      %p30 = por %p28, %p29
      %p31 = scmp.ne.s32.totalorder %s23, %s26
      %p32 = scmp.eq.s32.totalorder %s13, 0
      %p33 = por %p31, %p32
      %p34 = scmp.ne.s32.totalorder %s23, %s26
      %p35 = scmp.eq.s32.totalorder %s18, 1
      %p36 = por %p34, %p35
      %p37 = scmp.ne.s32.totalorder %s26, %s27
      %p38 = scmp.eq.s32.totalorder %s18, 0
      %p39 = por %p37, %p38
      %p40 = scmp.ne.s32.totalorder %s26, %s27
      %p41 = scmp.eq.s32.totalorder %s19, 1
      %p42 = por %p40, %p41
      %p44 = scmp.ne.s32.totalorder %s27, %s43
      %p45 = scmp.eq.s32.totalorder %s19, 0
      %p46 = por %p44, %p45
      %s48 = sadd.s32 %s47, 1
      %p51 = scmp.eq.s32.totalorder %s13, 1
      %p52 = scmp.ne.s32.totalorder %s47, %s49
      %p53 = scmp.eq.s32.totalorder %s13, 0
      %p54 = por %p52, %p53
      %p55 = scmp.ne.s32.totalorder %s47, %s49
      %p56 = scmp.eq.s32.totalorder %s18, 1
      %p57 = por %p55, %p56
      %p58 = scmp.ne.s32.totalorder %s49, %s50
      %p59 = scmp.eq.s32.totalorder %s18, 0
      %p60 = por %p58, %p59
      %p61 = scmp.ne.s32.totalorder %s49, %s50
      %p62 = scmp.eq.s32.totalorder %s19, 1
      %p63 = por %p61, %p62
      %p65 = scmp.ne.s32.totalorder %s50, %s64
      %p66 = scmp.eq.s32.totalorder %s19, 0
      %p67 = por %p65, %p66
      %s69 = sadd.s32 %s68, 1
      %p72 = scmp.eq.s32.totalorder %s13, 1
      %p73 = scmp.ne.s32.totalorder %s68, %s70
      %p74 = scmp.eq.s32.totalorder %s13, 0
      %p75 = por %p73, %p74
      %p76 = scmp.ne.s32.totalorder %s68, %s70
      %p77 = scmp.eq.s32.totalorder %s18, 1
      %p78 = por %p76, %p77
      %p79 = scmp.ne.s32.totalorder %s70, %s71
      %p80 = scmp.eq.s32.totalorder %s18, 0
      %p81 = por %p79, %p80
      %p82 = scmp.ne.s32.totalorder %s70, %s71
      %p83 = scmp.eq.s32.totalorder %s19, 1
      %p84 = por %p82, %p83
      %p86 = scmp.ne.s32.totalorder %s71, %s85
      %p87 = scmp.eq.s32.totalorder %s19, 0
      %p88 = por %p86, %p87
      %s89 = ssub.s32 %s13, %s20
      %p90 = scmp.eq.s32.totalorder %s89, 0
      %s92 = sadd.s32 %s91, 1
      %s93 = scalar_select %p90, %s91, %s92
      %p96 = pneg %p90
      %p97 = scmp.eq.s32.totalorder %s13, 1
      %p98 = por %p96, %p97
      %p99 = scmp.ne.s32.totalorder %s91, %s94
      %p100 = scmp.eq.s32.totalorder %s13, 0
      %p101 = por %p99, %p100
      %p102 = scmp.ne.s32.totalorder %s91, %s94
      %p103 = scmp.eq.s32.totalorder %s18, 1
      %p104 = por %p102, %p103
      %p105 = scmp.ne.s32.totalorder %s94, %s95
      %p106 = scmp.eq.s32.totalorder %s18, 0
      %p107 = por %p105, %p106
      %p108 = scmp.ne.s32.totalorder %s94, %s95
      %p109 = scmp.eq.s32.totalorder %s19, 1
      %p110 = por %p108, %p109
      %p112 = scmp.ne.s32.totalorder %s95, %s111
      %p113 = scmp.eq.s32.totalorder %s19, 0
      %p114 = por %p112, %p113
      %p115 = scmp.le.s32.totalorder 1, %s13
      %p116 = scmp.lt.s32.totalorder %s13, 3
      %p117 = pnand %p115, %p116
      %p118 = pneg %p117
      // Predicated region
      $region9: #{simple_model_forward.1} parent=5 // pred_check
        _
      $region10: #{simple_model_forward.1} parent=5 // pred_check_branch
        %120 = sbr.rel (%p117) target = $region12
      $region11: #{simple_model_forward.1} parent=5 // pred_region
        %s121 = ssub.s32 %s13, 1
        // Predicated region
        $region13: #{simple_model_forward.1} parent=11 // pred_check
          %p122 = pneg %p60
        $region14: #{simple_model_forward.1} parent=11 // pred_check_branch
          %124 = sbr.rel (%p122) target = $region16
        $region15: #{simple_model_forward.1} parent=11 // pred_region
          _
        $region16: #{simple_model_forward.1} parent=11 // pred_fallthru
          _
        // Predicated region
        $region17: #{simple_model_forward.1} parent=11 // pred_check
          %p125 = pneg %p81
        $region18: #{simple_model_forward.1} parent=11 // pred_check_branch
          %127 = sbr.rel (%p125) target = $region20
        $region19: #{simple_model_forward.1} parent=11 // pred_region
          _
        $region20: #{simple_model_forward.1} parent=11 // pred_fallthru
          _
      $region12: #{simple_model_forward.1} parent=5 // pred_fallthru
        _
      %p128 = scmp.lt.s32.totalorder %s13, 2
      // Predicated region
      $region21: #{simple_model_forward.1} parent=5 // pred_check
        %p129 = pneg %p128
      $region22: #{simple_model_forward.1} parent=5 // pred_check_branch
        %131 = sbr.rel (%p129) target = $region24
      $region23: #{simple_model_forward.1} parent=5 // pred_region
        // Predicated region
        $region25: #{simple_model_forward.1} parent=23 // pred_check
          %p132 = pneg %p33
        $region26: #{simple_model_forward.1} parent=23 // pred_check_branch
          %134 = sbr.rel (%p132) target = $region28
        $region27: #{simple_model_forward.1} parent=23 // pred_region
          %s135 = smul.u32 16, %s13
          %p136 = scmp.lt.s32.totalorder %s135, 31
          %s137 = scalar_select %p136, %s135, 31
          %s138 = smul.addr %s137, 8
          %s139 = scalar_lea.vmem %s0, %s138
          %s140 = smul.u32 16, %s13
        $region28: #{simple_model_forward.1} parent=23 // pred_fallthru
          _
      $region24: #{simple_model_forward.1} parent=5 // pred_fallthru
        _
      %p141 = scmp.le.s32.totalorder 1, %s13
      %p142 = scmp.lt.s32.totalorder %s13, 3
      %p143 = pnand %p141, %p142
      %p144 = pneg %p143
      // Predicated region
      $region29: #{simple_model_forward.1} parent=5 // pred_check
        _
      $region30: #{simple_model_forward.1} parent=5 // pred_check_branch
        %146 = sbr.rel (%p143) target = $region32
      $region31: #{simple_model_forward.1} parent=5 // pred_region
        %s147 = ssub.s32 %s13, 1
        %s148 = smul.u32 16, %s18
        %p149 = scmp.lt.s32.totalorder %s148, 31
        %s150 = scalar_select %p149, %s148, 31
        %s151 = smul.addr %s150, 8
        %s152 = scalar_lea.vmem %s0, %s151
        %p153 = pneg %p39
        %p154 = pneg %p36
        %p155 = pneg %p60
        %p156 = pneg %p57
        %p157 = pneg %p81
        %p158 = pneg %p78
        %p159 = pneg %p107
        %p160 = pneg %p104
        %s161 = sand.u32 %s94, 1
        %s162 = scalar_lea.sflag [#allocation4], %s161
        %s163 = sand.u32 %s94, 1
        %s164 = scalar_lea.vmem [#allocation3], %s163
        %s165 = smul.u32 16, %s18
        %p166 = scmp.lt.s32.totalorder %s165, 31
        %s167 = scalar_select %p166, %s165, 31
        %s168 = smul.addr %s167, 8
        %s169 = scalar_lea.vmem %s0, %s168
        %s170 = smul.u32 16, %s18
        %v171 = vld [vmem:[%s1] sm:$0x1]
        %v172 = vld [vmem:[%s169] sm:$0xff]
        %v173 = vld [vmem:[%s169 + $0x8] sm:$0xff]
        %v174 = vld [vmem:[%s169 + $0x10] sm:$0xff]
        %v175 = vld [vmem:[%s169 + $0x18] sm:$0xff]
        %v176 = vld [vmem:[%s169 + $0x20] sm:$0xff]
        %v177 = vld [vmem:[%s169 + $0x28] sm:$0xff]
        %v178 = vld [vmem:[%s169 + $0x30] sm:$0xff]
        %v179 = vld [vmem:[%s169 + $0x38] sm:$0xff]
        %v180 = vld [vmem:[%s169 + $0x40] sm:$0xff]
        %v181 = vld [vmem:[%s169 + $0x48] sm:$0xff]
        %v182 = vld [vmem:[%s169 + $0x50] sm:$0xff]
        %v183 = vld [vmem:[%s169 + $0x58] sm:$0xff]
        %v184 = vld [vmem:[%s169 + $0x60] sm:$0xff]
        %v185 = vld [vmem:[%s169 + $0x68] sm:$0xff]
        %v186 = vld [vmem:[%s169 + $0x70] sm:$0xff]
        %v187 = vld [vmem:[%s169 + $0x78] sm:$0xff]
        %s188 = sld [smem:[#allocation2]]
        %v189 = vstv %s188
        %vm190 = vcmask 80896
        %v192 = vsel %vm190, %v171, 0
        %v195 = vsel %vm190, %v172, 0
        %v198 = vsel %vm190, %v173, 0
        %v201 = vsel %vm190, %v174, 0
        %v204 = vsel %vm190, %v175, 0
        %v207 = vsel %vm190, %v176, 0
        %v210 = vsel %vm190, %v177, 0
        %v213 = vsel %vm190, %v178, 0
        %v216 = vsel %vm190, %v179, 0
        %v219 = vsel %vm190, %v180, 0
        %v222 = vsel %vm190, %v181, 0
        %v225 = vsel %vm190, %v182, 0
        %v228 = vsel %vm190, %v183, 0
        %v231 = vsel %vm190, %v184, 0
        %v234 = vsel %vm190, %v185, 0
        %v237 = vsel %vm190, %v186, 0
        %v240 = vsel %vm190, %v187, 0
        %242 = vmatpush.xpose.msra.mxu0 %v240
        %243 = vmatpush.xpose.msra.mxu0 %v237
        %244 = vmatpush.xpose.msra.mxu0 %v234
        %245 = vmatpush.xpose.msra.mxu0 %v231
        %246 = vmatpush.xpose.msra.mxu0 %v228
        %247 = vmatpush.xpose.msra.mxu0 %v225
        %248 = vmatpush.xpose.msra.mxu0 %v222
        %249 = vmatpush.xpose.msra.mxu0 %v219
        %250 = vmatpush.xpose.msra.mxu0 %v216
        %251 = vmatpush.xpose.msra.mxu0 %v213
        %252 = vmatpush.xpose.msra.mxu0 %v210
        %253 = vmatpush.xpose.msra.mxu0 %v207
        %254 = vmatpush.xpose.msra.mxu0 %v204
        %255 = vmatpush.xpose.msra.mxu0 %v201
        %256 = vmatpush.xpose.msra.mxu0 %v198
        %257 = vmatpush.xpose.msra.mxu0 %v195
        %258 = vmatmul.f32.gmra.mxu0 %v192
        %v259 = vpop.f32.mrf.mxu0
        %v260 = vadd.f32 %v189, %v259
        %261 = vdwg.mxu0
        %262 = vst [vmem:[%s164] sm:$0x1] %v260
        %s263 = sand.u32 %s94, 1
        %s264 = scalar_lea.sflag [#allocation4], %s263
        %s265 = sand.u32 %s94, 1
        %s266 = scalar_lea.vmem [#allocation3], %s265
        // Predicated region
        $region33: #{simple_model_forward.1} parent=31 // pred_check
          %p267 = pneg %p104
        $region34: #{simple_model_forward.1} parent=31 // pred_check_branch
          %269 = sbr.rel (%p267) target = $region36
        $region35: #{simple_model_forward.1} parent=31 // pred_region
          %271 = vsyncadd %s264, 0
          %s272 = scalar_lea.hbm %s3, %s18
          %s274 = sshll.u32 %s266, 4
          %s275 = int_to_ptr.vmem [resolvable:$true] %s274
          %s276 = sshll.u32 %s272, 4
          %s277 = int_to_ptr.hbm [resolvable:$true] %s276
          %279 = dma.vmem_to_hbm [thread:$0]  %s275, 16, %s277, %s264
        $region36: #{simple_model_forward.1} parent=31 // pred_fallthru
          _
      $region32: #{simple_model_forward.1} parent=5 // pred_fallthru
        _
      %p280 = scmp.le.s32.totalorder 2, %s13
      // Predicated region
      $region37: #{simple_model_forward.1} parent=5 // pred_check
        %p281 = pneg %p280
      $region38: #{simple_model_forward.1} parent=5 // pred_check_branch
        %283 = sbr.rel (%p281) target = $region40
      $region39: #{simple_model_forward.1} parent=5 // pred_region
        %s284 = ssub.s32 %s13, 2
        // Predicated region
        $region41: #{simple_model_forward.1} parent=39 // pred_check
          %p285 = pneg %p110
        $region42: #{simple_model_forward.1} parent=39 // pred_check_branch
          %287 = sbr.rel (%p285) target = $region44
        $region43: #{simple_model_forward.1} parent=39 // pred_region
          %s288 = sand.u32 %s95, 1
          %s289 = scalar_lea.sflag [#allocation4], %s288
          %s290 = sand.u32 %s95, 1
          %s291 = scalar_lea.vmem [#allocation3], %s290
          %293 = dma.done %s289, 16
        $region44: #{simple_model_forward.1} parent=39 // pred_fallthru
          _
      $region40: #{simple_model_forward.1} parent=5 // pred_fallthru
        _
    $region6: #{simple_model_forward.1} parent=1 // loop_footer
      %s17 = sadd.s32 1, %s13
    $region7: #{simple_model_forward.1} parent=1 // loop_footer_branch
      %12 = sbr.rel target = $region3
    $region8: #{simple_model_forward.1} parent=1 // loop_exit
      _
    %294 = vsyncpa [#allocation4], 1
    %s295 = scalar_lea.sflag [#allocation4], 1
    %296 = vsyncpa %s295, 1

</llo_original>
